<compile_context>
chip_gen: v7x
topology: tpu7x:2x2x1
jax: 0.10.0
libtpu: 0.0.40
codegen_flags: <defaults>
</compile_context>

<pallas_src>
import functools

import jax
import jax.numpy as jnp
from jax import lax
from jax.experimental import pallas as pl
from jax.experimental.pallas import tpu as pltpu

_EPS = 1e-8                               # matches F.cosine_similarity default eps
_LANES = 128
_TILE_BYTES_PER_INPUT = 2 * 1024 * 1024   # per-grid-step DMA per input (x3 in, x2 bufs)
_VMEM_LIMIT_BYTES = 48 * 1024 * 1024      # explicit scoped-VMEM limit (v7x-safe)


def _triplet_loss_kernel(sel_ref, a_ref, p_ref, n_ref, out_ref, *,
                         margin, batch, pack, mask_padding):
    """One batch tile.  a/p/n: (tile_rows, dp); sel: (dp, pack) 0/1 segment selector."""
    a = a_ref[...].astype(jnp.float32)
    p = p_ref[...].astype(jnp.float32)
    n = n_ref[...].astype(jnp.float32)
    sel = sel_ref[...]
    tile_rows = a.shape[0]

    mm = functools.partial(jnp.dot, preferred_element_type=jnp.float32)

    # Fused product + per-segment reduction on the MXU -> (tile_rows, pack) each.
    aa = mm(a * a, sel)
    pp = mm(p * p, sel)
    nn = mm(n * n, sel)
    ap = mm(a * p, sel)
    an = mm(a * n, sel)

    eps2 = _EPS * _EPS
    inv_p = lax.rsqrt(jnp.maximum(aa * pp, eps2))
    inv_n = lax.rsqrt(jnp.maximum(aa * nn, eps2))
    # (1 - sim_p) - (1 - sim_n) + margin  ==  sim_n - sim_p + margin
    h = jnp.maximum(an * inv_n - ap * inv_p + margin, 0.0)      # (tile_rows, pack)

    if mask_padding:  # trace-time gate: only emitted when batch padding exists
        i = pl.program_id(0)
        t = lax.broadcasted_iota(jnp.int32, h.shape, 0)
        k = lax.broadcasted_iota(jnp.int32, h.shape, 1)
        global_row = (i * tile_rows + t) * pack + k
        h = jnp.where(global_row < batch, h, 0.0)

    # Row reduction on the MXU; only a tiny pack-lane reduce remains on the XLU.
    ones_row = jnp.ones((1, tile_rows), jnp.float32)
    part = mm(ones_row, h)                                      # (1, pack)
    s = jnp.sum(part, keepdims=True)                            # (1, 1)
    out_ref[...] = jnp.broadcast_to(s.reshape(1, 1, 1), out_ref.shape)


def triplet_loss(anchor, positive, negative, margin, *, max_tile_rows=None):
    """anchor/positive/negative: (B, D) arrays (f32 or bf16). Returns scalar f32 loss."""
    B, D = anchor.shape
    assert positive.shape == (B, D) and negative.shape == (B, D)

    # ---- feature packing/padding: always lane-dense (dp multiple of 128) ----
    if D >= _LANES:
        pack = 1
        seg = -(-D // _LANES) * _LANES          # pad D up to a multiple of 128
    else:
        pack = 1
        while pack * 2 <= _LANES // D:          # largest power-of-two pack
            pack *= 2
        seg = _LANES // pack                    # per-row segment width (>= D)
    dp = pack * seg                             # lane width the kernel sees

    # ---- tile size from an explicit per-input VMEM budget ----
    itemsize = jnp.dtype(anchor.dtype).itemsize
    row_align = max(8, 32 // itemsize)          # 8 for f32, 16 for bf16
    tile_rows = _TILE_BYTES_PER_INPUT // (dp * itemsize)
    if max_tile_rows is not None:
        tile_rows = min(tile_rows, max_tile_rows)
    tile_rows = max(row_align, (tile_rows // row_align) * row_align)

    packed_rows = -(-B // pack)
    rows_ceil = -(-packed_rows // row_align) * row_align
    tile_rows = min(tile_rows, rows_ceil)
    num_tiles = -(-packed_rows // tile_rows)
    rows_padded = num_tiles * tile_rows
    b_padded = rows_padded * pack
    mask_padding = (b_padded != B)

    def _prep(x):
        pad_rows, pad_feat = b_padded - B, seg - D
        if pad_rows or pad_feat:
            x = jnp.pad(x, ((0, pad_rows), (0, pad_feat)))
        return x.reshape(rows_padded, dp)       # pack rows folded into one lane-row

    a2, p2, n2 = _prep(anchor), _prep(positive), _prep(negative)

    # 0/1 segment selector (dp, pack): column k selects lanes of segment k.
    seg_id = jnp.arange(dp, dtype=jnp.int32) // seg
    sel = (seg_id[:, None] == jnp.arange(pack, dtype=jnp.int32)[None, :]).astype(jnp.float32)

    kernel = functools.partial(
        _triplet_loss_kernel, margin=float(margin), batch=B, pack=pack,
        mask_padding=mask_padding)

    partials = pl.pallas_call(
        kernel,
        out_shape=jax.ShapeDtypeStruct((num_tiles, 8, 128), jnp.float32),
        grid_spec=pltpu.PrefetchScalarGridSpec(
            num_scalar_prefetch=0,
            grid=(num_tiles,),
            in_specs=[
                pl.BlockSpec((dp, pack), lambda i: (0, 0)),          # constant selector
                pl.BlockSpec((tile_rows, dp), lambda i: (i, 0)),
                pl.BlockSpec((tile_rows, dp), lambda i: (i, 0)),
                pl.BlockSpec((tile_rows, dp), lambda i: (i, 0)),
            ],
            out_specs=pl.BlockSpec((1, 8, 128), lambda i: (i, 0, 0)),
        ),
        compiler_params=pltpu.CompilerParams(
            # Per-tile independent partials -> batch axis can split across TCs (v7x).
            dimension_semantics=("parallel",),
            vmem_limit_bytes=_VMEM_LIMIT_BYTES,
        ),
    )(sel, a2, p2, n2)

    total = jnp.sum(partials[:, 0, 0])
    return total * (1.0 / B)


def _reference_triplet_loss(anchor, positive, negative, margin):
    def cos_sim(x1, x2):
        num = jnp.sum(x1 * x2, axis=1)
        den = jnp.sqrt(
            jnp.maximum(jnp.sum(x1 * x1, axis=1) * jnp.sum(x2 * x2, axis=1),
                        _EPS * _EPS))
        return num / den

    d_pos = 1.0 - cos_sim(anchor, positive)
    d_neg = 1.0 - cos_sim(anchor, negative)
    return jnp.mean(jnp.maximum(d_pos - d_neg + margin, 0.0))


if __name__ == "__main__":
    margin = 0.5
    key = jax.random.PRNGKey(0)

    # (B, D, dtype, max_tile_rows):
    #   packed small-D path, lane-dense D=128 path, non-divisor D with multi-tile
    #   parallel grid + masking, D > 128 feature padding, bf16 streaming.
    configs = [
        (8, 32, jnp.float32, None),
        (16, 128, jnp.float32, None),
        (96, 48, jnp.float32, 32),
        (64, 200, jnp.float32, None),
        (32, 96, jnp.bfloat16, None),
    ]
    for (B, D, dtype, mtr) in configs:
        key, ka, kp, kn = jax.random.split(key, 4)
        anchor = jax.random.normal(ka, (B, D), dtype=jnp.float32).astype(dtype)
        positive = jax.random.normal(kp, (B, D), dtype=jnp.float32).astype(dtype)
        negative = jax.random.normal(kn, (B, D), dtype=jnp.float32).astype(dtype)

        loss = triplet_loss(anchor, positive, negative, margin, max_tile_rows=mtr)
        loss = jax.block_until_ready(loss)

        ref = _reference_triplet_loss(anchor.astype(jnp.float32),
                                      positive.astype(jnp.float32),
                                      negative.astype(jnp.float32), margin)
        assert jnp.allclose(loss, ref, atol=1e-4, rtol=1e-4), (B, D, float(loss), float(ref))

    print("KERNEL_OK")
</pallas_src>

<mosaic_0001>
module attributes {stable_mosaic.version = 11 : i64} {
  func.func @_triplet_loss_kernel(%arg0: i32, %arg1: memref<128x4xf32, #tpu.memory_space<vmem>>, %arg2: memref<8x128xf32, #tpu.memory_space<vmem>>, %arg3: memref<8x128xf32, #tpu.memory_space<vmem>>, %arg4: memref<8x128xf32, #tpu.memory_space<vmem>>, %arg5: memref<1x8x128xf32, #tpu.memory_space<vmem>>) attributes {dimension_semantics = [#tpu.dimension_semantics<parallel>], iteration_bounds = array<i64: 1>, scalar_prefetch = 0 : i64, scratch_operands = 0 : i64, tpu.core_type = #tpu.core_type<tc>, window_params = [{pipeline_mode = #tpu.pipeline_mode<synchronous>, transform_indices = @transform_0, window_bounds = array<i64: 128, 4>}, {transform_indices = @transform_1, window_bounds = array<i64: 8, 128>}, {transform_indices = @transform_2, window_bounds = array<i64: 8, 128>}, {transform_indices = @transform_3, window_bounds = array<i64: 8, 128>}, {transform_indices = @transform_4, window_bounds = array<i64: 1, 8, 128>}]} {
    %c0 = arith.constant 0 : index
    %c0_0 = arith.constant 0 : index
    %0 = vector.load %arg2[%c0, %c0_0] : memref<8x128xf32, #tpu.memory_space<vmem>>, vector<8x128xf32>
    %c0_1 = arith.constant 0 : index
    %c0_2 = arith.constant 0 : index
    %1 = vector.load %arg3[%c0_1, %c0_2] : memref<8x128xf32, #tpu.memory_space<vmem>>, vector<8x128xf32>
    %c0_3 = arith.constant 0 : index
    %c0_4 = arith.constant 0 : index
    %2 = vector.load %arg4[%c0_3, %c0_4] : memref<8x128xf32, #tpu.memory_space<vmem>>, vector<8x128xf32>
    %c0_5 = arith.constant 0 : index
    %c0_6 = arith.constant 0 : index
    %3 = vector.load %arg1[%c0_5, %c0_6] : memref<128x4xf32, #tpu.memory_space<vmem>>, vector<128x4xf32>
    %4 = arith.mulf %0, %0 : vector<8x128xf32>
    %cst = arith.constant dense<0.000000e+00> : vector<8x4xf32>
    %5 = tpu.matmul %4, %3, %cst {dimension_numbers = #tpu.dot_dimension_numbers<[1], [0], [0], [1], [0, 0, 1, 1], [], []>} : vector<8x128xf32>, vector<128x4xf32>, vector<8x4xf32> -> vector<8x4xf32>
    %6 = arith.mulf %1, %1 : vector<8x128xf32>
    %cst_7 = arith.constant dense<0.000000e+00> : vector<8x4xf32>
    %7 = tpu.matmul %6, %3, %cst_7 {dimension_numbers = #tpu.dot_dimension_numbers<[1], [0], [0], [1], [0, 0, 1, 1], [], []>} : vector<8x128xf32>, vector<128x4xf32>, vector<8x4xf32> -> vector<8x4xf32>
    %8 = arith.mulf %2, %2 : vector<8x128xf32>
    %cst_8 = arith.constant dense<0.000000e+00> : vector<8x4xf32>
    %9 = tpu.matmul %8, %3, %cst_8 {dimension_numbers = #tpu.dot_dimension_numbers<[1], [0], [0], [1], [0, 0, 1, 1], [], []>} : vector<8x128xf32>, vector<128x4xf32>, vector<8x4xf32> -> vector<8x4xf32>
    %10 = arith.mulf %0, %1 : vector<8x128xf32>
    %cst_9 = arith.constant dense<0.000000e+00> : vector<8x4xf32>
    %11 = tpu.matmul %10, %3, %cst_9 {dimension_numbers = #tpu.dot_dimension_numbers<[1], [0], [0], [1], [0, 0, 1, 1], [], []>} : vector<8x128xf32>, vector<128x4xf32>, vector<8x4xf32> -> vector<8x4xf32>
    %12 = arith.mulf %0, %2 : vector<8x128xf32>
    %cst_10 = arith.constant dense<0.000000e+00> : vector<8x4xf32>
    %13 = tpu.matmul %12, %3, %cst_10 {dimension_numbers = #tpu.dot_dimension_numbers<[1], [0], [0], [1], [0, 0, 1, 1], [], []>} : vector<8x128xf32>, vector<128x4xf32>, vector<8x4xf32> -> vector<8x4xf32>
    %14 = arith.mulf %5, %7 : vector<8x4xf32>
    %cst_11 = arith.constant 1.000000e-16 : f32
    %15 = vector.broadcast %cst_11 : f32 to vector<8x4xf32>
    %16 = arith.maximumf %14, %15 : vector<8x4xf32>
    %17 = math.rsqrt %16 : vector<8x4xf32>
    %18 = arith.mulf %5, %9 : vector<8x4xf32>
    %cst_12 = arith.constant 1.000000e-16 : f32
    %19 = vector.broadcast %cst_12 : f32 to vector<8x4xf32>
    %20 = arith.maximumf %18, %19 : vector<8x4xf32>
    %21 = math.rsqrt %20 : vector<8x4xf32>
    %22 = arith.mulf %13, %21 : vector<8x4xf32>
    %23 = arith.mulf %11, %17 : vector<8x4xf32>
    %24 = arith.subf %22, %23 : vector<8x4xf32>
    %cst_13 = arith.constant 5.000000e-01 : f32
    %25 = vector.broadcast %cst_13 : f32 to vector<8x4xf32>
    %26 = arith.addf %24, %25 : vector<8x4xf32>
    %cst_14 = arith.constant 0.000000e+00 : f32
    %27 = vector.broadcast %cst_14 : f32 to vector<8x4xf32>
    %28 = arith.maximumf %26, %27 : vector<8x4xf32>
    %29 = tpu.iota {dimensions = array<i32: 0>} : vector<8x4xi32>
    %30 = tpu.iota {dimensions = array<i32: 1>} : vector<8x4xi32>
    %c8_i32 = arith.constant 8 : i32
    %31 = arith.muli %arg0, %c8_i32 : i32
    %32 = vector.broadcast %31 : i32 to vector<8x4xi32>
    %33 = arith.addi %32, %29 : vector<8x4xi32>
    %c4_i32 = arith.constant 4 : i32
    %34 = vector.broadcast %c4_i32 : i32 to vector<8x4xi32>
    %35 = arith.muli %33, %34 : vector<8x4xi32>
    %36 = arith.addi %35, %30 : vector<8x4xi32>
    %c8_i32_15 = arith.constant 8 : i32
    %37 = vector.broadcast %c8_i32_15 : i32 to vector<8x4xi32>
    %38 = arith.cmpi slt, %36, %37 : vector<8x4xi32>
    %cst_16 = arith.constant 0.000000e+00 : f32
    %39 = vector.broadcast %cst_16 : f32 to vector<8x4xf32>
    %40 = arith.select %38, %28, %39 : vector<8x4xi1>, vector<8x4xf32>
    %cst_17 = arith.constant 1.000000e+00 : f32
    %41 = vector.broadcast %cst_17 : f32 to vector<1x8xf32>
    %cst_18 = arith.constant dense<0.000000e+00> : vector<1x4xf32>
    %42 = tpu.matmul %41, %40, %cst_18 {dimension_numbers = #tpu.dot_dimension_numbers<[1], [0], [0], [1], [0, 0, 1, 1], [], []>} : vector<1x8xf32>, vector<8x4xf32>, vector<1x4xf32> -> vector<1x4xf32>
    %43 = vector.shape_cast %42 : vector<1x4xf32> to vector<1x1x4xf32>
    %cst_19 = arith.constant dense<0.000000e+00> : vector<1xf32>
    %44 = vector.multi_reduction <add>, %43, %cst_19 [1, 2] : vector<1x1x4xf32> to vector<1xf32>
    %45 = vector.shape_cast %44 : vector<1xf32> to vector<1x1x1xf32>
    %46 = vector.extract %45[0, 0, 0] : f32 from vector<1x1x1xf32>
    %47 = vector.broadcast %46 : f32 to vector<1x1xf32>
    %48 = vector.shape_cast %47 : vector<1x1xf32> to vector<1x1x1xf32>
    %49 = vector.shape_cast %48 : vector<1x1x1xf32> to vector<1x1x1xf32>
    %50 = vector.broadcast %49 : vector<1x1x1xf32> to vector<1x8x128xf32>
    %c0_20 = arith.constant 0 : index
    %c0_21 = arith.constant 0 : index
    %c0_22 = arith.constant 0 : index
    %51 = vector.load %arg5[%c0_20, %c0_21, %c0_22] : memref<1x8x128xf32, #tpu.memory_space<vmem>>, vector<1x8x128xf32>
    tpu.vector_store %arg5[%c0_20, %c0_21, %c0_22], %50 {strides = array<i32>} : memref<1x8x128xf32, #tpu.memory_space<vmem>>, vector<1x8x128xf32>,
    return
  }
  func.func @transform_0(%arg0: i32) -> (i32, i32) {
    %c0_i32 = arith.constant 0 : i32
    %c0_i32_0 = arith.constant 0 : i32
    %c0_i32_1 = arith.constant 0 : i32
    return %c0_i32, %c0_i32_0 : i32, i32
  }
  func.func @transform_1(%arg0: i32) -> (i32, i32) {
    %c0_i32 = arith.constant 0 : i32
    %c0_i32_0 = arith.constant 0 : i32
    return %arg0, %c0_i32 : i32, i32
  }
  func.func @transform_2(%arg0: i32) -> (i32, i32) {
    %c0_i32 = arith.constant 0 : i32
    %c0_i32_0 = arith.constant 0 : i32
    return %arg0, %c0_i32 : i32, i32
  }
  func.func @transform_3(%arg0: i32) -> (i32, i32) {
    %c0_i32 = arith.constant 0 : i32
    %c0_i32_0 = arith.constant 0 : i32
    return %arg0, %c0_i32 : i32, i32
  }
  func.func @transform_4(%arg0: i32) -> (i32, i32, i32) {
    %c0_i32 = arith.constant 0 : i32
    %c0_i32_0 = arith.constant 0 : i32
    %c0_i32_1 = arith.constant 0 : i32
    return %arg0, %c0_i32, %c0_i32_0 : i32, i32, i32
  }
}

</mosaic_0001>

<llo_original>
// kernel: tpu_custom_call.1
$region0: #{tpu_custom_call.1}
  #allocation0 [shape = 'u32[]', space=smem, size = 0x4, offset = 0x4, fixed_abs, tag = 'smem constant byte address 0x4 - core index']
  #allocation1 [shape = 'u32[144,128]{1,0:T(1,128)}', space=vmem, size = 0x12000, scoped, tag = 'internal scratch']
  %s0 = inlined_call_operand.vmem [shape: f32[128,4], index: 0, kind: input, shape index: {}]
  %s1 = inlined_call_operand.vmem [shape: f32[8,128], index: 1, kind: input, shape index: {}]
  %s2 = inlined_call_operand.vmem [shape: f32[8,128], index: 2, kind: input, shape index: {}]
  %s3 = inlined_call_operand.vmem [shape: f32[8,128], index: 3, kind: input, shape index: {}]
  %s4 = inlined_call_operand.hbm [shape: f32[1,8,128], index: 4, kind: output, shape index: {}]
  %s5 = sld [smem:[#allocation0]]
  $region26: #{tpu_custom_call.1} parent=0
    _
  %s7 = ssub.s32 1, %s5
  %s8 = scalar_select 0, %s7, %s5
  $region1: #{tpu_custom_call.1} parent=0
    #allocation2 [shape = 'u8[4096]{0}', space=vmem, size = 0x1000, scoped, tag = 'output window, operand 0, single buffered']
    #allocation3 [shape = 's32[1]{0}', space=sflag, size = 0x4, scoped, tag = 'scoped memory for tpu_custom_call.1']
    %9 = vsyncpa [#allocation3], 0
    // Predicated region
    $region2: #{tpu_custom_call.1} parent=1 // pred_check
      _
    $region3: #{tpu_custom_call.1} parent=1 // pred_check_branch
      %11 = sbr.rel (0) target = $region5
    $region4: #{tpu_custom_call.1} parent=1 // pred_region
      _
    $region5: #{tpu_custom_call.1} parent=1 // pred_fallthru
      _
    // Predicated region
    $region6: #{tpu_custom_call.1} parent=1 // pred_check
      _
    $region7: #{tpu_custom_call.1} parent=1 // pred_check_branch
      %13 = sbr.rel (0) target = $region9
    $region8: #{tpu_custom_call.1} parent=1 // pred_region
      _
    $region9: #{tpu_custom_call.1} parent=1 // pred_fallthru
      _
    // Predicated region
    $region10: #{tpu_custom_call.1} parent=1 // pred_check
      _
    $region11: #{tpu_custom_call.1} parent=1 // pred_check_branch
      %15 = sbr.rel (0) target = $region13
    $region12: #{tpu_custom_call.1} parent=1 // pred_region
      _
    $region13: #{tpu_custom_call.1} parent=1 // pred_fallthru
      _
    // Predicated region
    $region14: #{tpu_custom_call.1} parent=1 // pred_check
      _
    $region15: #{tpu_custom_call.1} parent=1 // pred_check_branch
      %17 = sbr.rel (0) target = $region17
    $region16: #{tpu_custom_call.1} parent=1 // pred_region
      _
    $region17: #{tpu_custom_call.1} parent=1 // pred_fallthru
      _
    %v18 = vld [vmem:[%s1] sm:$0xff]
    %v19 = vld [vmem:[%s2] sm:$0xff]
    %v20 = vld [vmem:[%s3] sm:$0xff]
    %v21 = vld [vmem:[%s0] sm:$0xff]
    %v22 = vld [vmem:[%s0 + $0x8] sm:$0xff]
    %v23 = vld [vmem:[%s0 + $0x10] sm:$0xff]
    %v24 = vld [vmem:[%s0 + $0x18] sm:$0xff]
    %v25 = vld [vmem:[%s0 + $0x20] sm:$0xff]
    %v26 = vld [vmem:[%s0 + $0x28] sm:$0xff]
    %v27 = vld [vmem:[%s0 + $0x30] sm:$0xff]
    %v28 = vld [vmem:[%s0 + $0x38] sm:$0xff]
    %v29 = vld [vmem:[%s0 + $0x40] sm:$0xff]
    %v30 = vld [vmem:[%s0 + $0x48] sm:$0xff]
    %v31 = vld [vmem:[%s0 + $0x50] sm:$0xff]
    %v32 = vld [vmem:[%s0 + $0x58] sm:$0xff]
    %v33 = vld [vmem:[%s0 + $0x60] sm:$0xff]
    %v34 = vld [vmem:[%s0 + $0x68] sm:$0xff]
    %v35 = vld [vmem:[%s0 + $0x70] sm:$0xff]
    %v36 = vld [vmem:[%s0 + $0x78] sm:$0xff]
    %v37 = vmul.f32 %v18, %v18
    %38 = vmatprep.subr.mxu0 0.0
    %39 = vmatpush1.msra.mxu0 %v21
    %40 = vmatprep.subr.mxu0 0.0
    %41 = vmatpush1.msra.mxu0 %v22
    %42 = vmatprep.subr.mxu0 0.0
    %43 = vmatpush1.msra.mxu0 %v23
    %44 = vmatprep.subr.mxu0 0.0
    %45 = vmatpush1.msra.mxu0 %v24
    %46 = vmatprep.subr.mxu0 0.0
    %47 = vmatpush1.msra.mxu0 %v25
    %48 = vmatprep.subr.mxu0 0.0
    %49 = vmatpush1.msra.mxu0 %v26
    %50 = vmatprep.subr.mxu0 0.0
    %51 = vmatpush1.msra.mxu0 %v27
    %52 = vmatprep.subr.mxu0 0.0
    %53 = vmatpush1.msra.mxu0 %v28
    %54 = vmatprep.subr.mxu0 0.0
    %55 = vmatpush1.msra.mxu0 %v29
    %56 = vmatprep.subr.mxu0 0.0
    %57 = vmatpush1.msra.mxu0 %v30
    %58 = vmatprep.subr.mxu0 0.0
    %59 = vmatpush1.msra.mxu0 %v31
    %60 = vmatprep.subr.mxu0 0.0
    %61 = vmatpush1.msra.mxu0 %v32
    %62 = vmatprep.subr.mxu0 0.0
    %63 = vmatpush1.msra.mxu0 %v33
    %64 = vmatprep.subr.mxu0 0.0
    %65 = vmatpush1.msra.mxu0 %v34
    %66 = vmatprep.subr.mxu0 0.0
    %67 = vmatpush1.msra.mxu0 %v35
    %68 = vmatprep.subr.mxu0 0.0
    %69 = vmatpush1.msra.mxu0 %v36
    %70 = vmatprep.subr.mxu0 0.0
    %71 = vmatpush1.msra.mxu0 0.0
    %72 = vmatprep.subr.mxu0 0.0
    %73 = vmatpush1.msra.mxu0 0.0
    %74 = vmatprep.subr.mxu0 0.0
    %75 = vmatpush1.msra.mxu0 0.0
    %76 = vmatprep.subr.mxu0 0.0
    %77 = vmatpush1.msra.mxu0 0.0
    %78 = vmatprep.subr.mxu0 0.0
    %79 = vmatpush1.msra.mxu0 0.0
    %80 = vmatprep.subr.mxu0 0.0
    %81 = vmatpush1.msra.mxu0 0.0
    %82 = vmatprep.subr.mxu0 0.0
    %83 = vmatpush1.msra.mxu0 0.0
    %84 = vmatprep.subr.mxu0 0.0
    %85 = vmatpush1.msra.mxu0 0.0
    %86 = vmatprep.subr.mxu0 0.0
    %87 = vmatpush1.msra.mxu0 0.0
    %88 = vmatprep.subr.mxu0 0.0
    %89 = vmatpush1.msra.mxu0 0.0
    %90 = vmatprep.subr.mxu0 0.0
    %91 = vmatpush1.msra.mxu0 0.0
    %92 = vmatprep.subr.mxu0 0.0
    %93 = vmatpush1.msra.mxu0 0.0
    %94 = vmatprep.subr.mxu0 0.0
    %95 = vmatpush1.msra.mxu0 0.0
    %96 = vmatprep.subr.mxu0 0.0
    %97 = vmatpush1.msra.mxu0 0.0
    %98 = vmatprep.subr.mxu0 0.0
    %99 = vmatpush1.msra.mxu0 0.0
    %100 = vmatprep.subr.mxu0 0.0
    %101 = vmatpush1.msra.mxu0 0.0
    %102 = vmatprep.mubr.f32.mxu0 0.0
    %103 = vmatmul.mubr.f32.gmra.mrb[0].mxu0 %v37
    %v104 = vpop.f32.mrb[0].mxu0
    %v105 = vadd.f32 0.0, %v104
    %v106 = vpop.f32.mrb[0].mxu0
    %107 = vdwg.mxu0
    %v108 = vmul.f32 %v19, %v19
    %109 = vmatprep.subr.mxu0 0.0
    %110 = vmatpush1.msra.mxu0 %v21
    %111 = vmatprep.subr.mxu0 0.0
    %112 = vmatpush1.msra.mxu0 %v22
    %113 = vmatprep.subr.mxu0 0.0
    %114 = vmatpush1.msra.mxu0 %v23
    %115 = vmatprep.subr.mxu0 0.0
    %116 = vmatpush1.msra.mxu0 %v24
    %117 = vmatprep.subr.mxu0 0.0
    %118 = vmatpush1.msra.mxu0 %v25
    %119 = vmatprep.subr.mxu0 0.0
    %120 = vmatpush1.msra.mxu0 %v26
    %121 = vmatprep.subr.mxu0 0.0
    %122 = vmatpush1.msra.mxu0 %v27
    %123 = vmatprep.subr.mxu0 0.0
    %124 = vmatpush1.msra.mxu0 %v28
    %125 = vmatprep.subr.mxu0 0.0
    %126 = vmatpush1.msra.mxu0 %v29
    %127 = vmatprep.subr.mxu0 0.0
    %128 = vmatpush1.msra.mxu0 %v30
    %129 = vmatprep.subr.mxu0 0.0
    %130 = vmatpush1.msra.mxu0 %v31
    %131 = vmatprep.subr.mxu0 0.0
    %132 = vmatpush1.msra.mxu0 %v32
    %133 = vmatprep.subr.mxu0 0.0
    %134 = vmatpush1.msra.mxu0 %v33
    %135 = vmatprep.subr.mxu0 0.0
    %136 = vmatpush1.msra.mxu0 %v34
    %137 = vmatprep.subr.mxu0 0.0
    %138 = vmatpush1.msra.mxu0 %v35
    %139 = vmatprep.subr.mxu0 0.0
    %140 = vmatpush1.msra.mxu0 %v36
    %141 = vmatprep.subr.mxu0 0.0
    %142 = vmatpush1.msra.mxu0 0.0
    %143 = vmatprep.subr.mxu0 0.0
    %144 = vmatpush1.msra.mxu0 0.0
    %145 = vmatprep.subr.mxu0 0.0
    %146 = vmatpush1.msra.mxu0 0.0
    %147 = vmatprep.subr.mxu0 0.0
    %148 = vmatpush1.msra.mxu0 0.0
    %149 = vmatprep.subr.mxu0 0.0
    %150 = vmatpush1.msra.mxu0 0.0
    %151 = vmatprep.subr.mxu0 0.0
    %152 = vmatpush1.msra.mxu0 0.0
    %153 = vmatprep.subr.mxu0 0.0
    %154 = vmatpush1.msra.mxu0 0.0
    %155 = vmatprep.subr.mxu0 0.0
    %156 = vmatpush1.msra.mxu0 0.0
    %157 = vmatprep.subr.mxu0 0.0
    %158 = vmatpush1.msra.mxu0 0.0
    %159 = vmatprep.subr.mxu0 0.0
    %160 = vmatpush1.msra.mxu0 0.0
    %161 = vmatprep.subr.mxu0 0.0
    %162 = vmatpush1.msra.mxu0 0.0
    %163 = vmatprep.subr.mxu0 0.0
    %164 = vmatpush1.msra.mxu0 0.0
    %165 = vmatprep.subr.mxu0 0.0
    %166 = vmatpush1.msra.mxu0 0.0
    %167 = vmatprep.subr.mxu0 0.0
    %168 = vmatpush1.msra.mxu0 0.0
    %169 = vmatprep.subr.mxu0 0.0
    %170 = vmatpush1.msra.mxu0 0.0
    %171 = vmatprep.subr.mxu0 0.0
    %172 = vmatpush1.msra.mxu0 0.0
    %173 = vmatprep.mubr.f32.mxu0 0.0
    %174 = vmatmul.mubr.f32.gmra.mrb[0].mxu0 %v108
    %v175 = vpop.f32.mrb[0].mxu0
    %v176 = vadd.f32 0.0, %v175
    %v177 = vpop.f32.mrb[0].mxu0
    %178 = vdwg.mxu0
    %v179 = vmul.f32 %v20, %v20
    %180 = vmatprep.subr.mxu0 0.0
    %181 = vmatpush1.msra.mxu0 %v21
    %182 = vmatprep.subr.mxu0 0.0
    %183 = vmatpush1.msra.mxu0 %v22
    %184 = vmatprep.subr.mxu0 0.0
    %185 = vmatpush1.msra.mxu0 %v23
    %186 = vmatprep.subr.mxu0 0.0
    %187 = vmatpush1.msra.mxu0 %v24
    %188 = vmatprep.subr.mxu0 0.0
    %189 = vmatpush1.msra.mxu0 %v25
    %190 = vmatprep.subr.mxu0 0.0
    %191 = vmatpush1.msra.mxu0 %v26
    %192 = vmatprep.subr.mxu0 0.0
    %193 = vmatpush1.msra.mxu0 %v27
    %194 = vmatprep.subr.mxu0 0.0
    %195 = vmatpush1.msra.mxu0 %v28
    %196 = vmatprep.subr.mxu0 0.0
    %197 = vmatpush1.msra.mxu0 %v29
    %198 = vmatprep.subr.mxu0 0.0
    %199 = vmatpush1.msra.mxu0 %v30
    %200 = vmatprep.subr.mxu0 0.0
    %201 = vmatpush1.msra.mxu0 %v31
    %202 = vmatprep.subr.mxu0 0.0
    %203 = vmatpush1.msra.mxu0 %v32
    %204 = vmatprep.subr.mxu0 0.0
    %205 = vmatpush1.msra.mxu0 %v33
    %206 = vmatprep.subr.mxu0 0.0
    %207 = vmatpush1.msra.mxu0 %v34
    %208 = vmatprep.subr.mxu0 0.0
    %209 = vmatpush1.msra.mxu0 %v35
    %210 = vmatprep.subr.mxu0 0.0
    %211 = vmatpush1.msra.mxu0 %v36
    %212 = vmatprep.subr.mxu0 0.0
    %213 = vmatpush1.msra.mxu0 0.0
    %214 = vmatprep.subr.mxu0 0.0
    %215 = vmatpush1.msra.mxu0 0.0
    %216 = vmatprep.subr.mxu0 0.0
    %217 = vmatpush1.msra.mxu0 0.0
    %218 = vmatprep.subr.mxu0 0.0
    %219 = vmatpush1.msra.mxu0 0.0
    %220 = vmatprep.subr.mxu0 0.0
    %221 = vmatpush1.msra.mxu0 0.0
    %222 = vmatprep.subr.mxu0 0.0
    %223 = vmatpush1.msra.mxu0 0.0
    %224 = vmatprep.subr.mxu0 0.0
    %225 = vmatpush1.msra.mxu0 0.0
    %226 = vmatprep.subr.mxu0 0.0
    %227 = vmatpush1.msra.mxu0 0.0
    %228 = vmatprep.subr.mxu0 0.0
    %229 = vmatpush1.msra.mxu0 0.0
    %230 = vmatprep.subr.mxu0 0.0
    %231 = vmatpush1.msra.mxu0 0.0
    %232 = vmatprep.subr.mxu0 0.0
    %233 = vmatpush1.msra.mxu0 0.0
    %234 = vmatprep.subr.mxu0 0.0
    %235 = vmatpush1.msra.mxu0 0.0
    %236 = vmatprep.subr.mxu0 0.0
    %237 = vmatpush1.msra.mxu0 0.0
    %238 = vmatprep.subr.mxu0 0.0
    %239 = vmatpush1.msra.mxu0 0.0
    %240 = vmatprep.subr.mxu0 0.0
    %241 = vmatpush1.msra.mxu0 0.0
    %242 = vmatprep.subr.mxu0 0.0
    %243 = vmatpush1.msra.mxu0 0.0
    %244 = vmatprep.mubr.f32.mxu0 0.0
    %245 = vmatmul.mubr.f32.gmra.mrb[0].mxu0 %v179
    %v246 = vpop.f32.mrb[0].mxu0
    %v247 = vadd.f32 0.0, %v246
    %v248 = vpop.f32.mrb[0].mxu0
    %249 = vdwg.mxu0
    %v250 = vmul.f32 %v18, %v19
    %251 = vmatprep.subr.mxu0 0.0
    %252 = vmatpush1.msra.mxu0 %v21
    %253 = vmatprep.subr.mxu0 0.0
    %254 = vmatpush1.msra.mxu0 %v22
    %255 = vmatprep.subr.mxu0 0.0
    %256 = vmatpush1.msra.mxu0 %v23
    %257 = vmatprep.subr.mxu0 0.0
    %258 = vmatpush1.msra.mxu0 %v24
    %259 = vmatprep.subr.mxu0 0.0
    %260 = vmatpush1.msra.mxu0 %v25
    %261 = vmatprep.subr.mxu0 0.0
    %262 = vmatpush1.msra.mxu0 %v26
    %263 = vmatprep.subr.mxu0 0.0
    %264 = vmatpush1.msra.mxu0 %v27
    %265 = vmatprep.subr.mxu0 0.0
    %266 = vmatpush1.msra.mxu0 %v28
    %267 = vmatprep.subr.mxu0 0.0
    %268 = vmatpush1.msra.mxu0 %v29
    %269 = vmatprep.subr.mxu0 0.0
    %270 = vmatpush1.msra.mxu0 %v30
    %271 = vmatprep.subr.mxu0 0.0
    %272 = vmatpush1.msra.mxu0 %v31
    %273 = vmatprep.subr.mxu0 0.0
    %274 = vmatpush1.msra.mxu0 %v32
    %275 = vmatprep.subr.mxu0 0.0
    %276 = vmatpush1.msra.mxu0 %v33
    %277 = vmatprep.subr.mxu0 0.0
    %278 = vmatpush1.msra.mxu0 %v34
    %279 = vmatprep.subr.mxu0 0.0
    %280 = vmatpush1.msra.mxu0 %v35
    %281 = vmatprep.subr.mxu0 0.0
    %282 = vmatpush1.msra.mxu0 %v36
    %283 = vmatprep.subr.mxu0 0.0
    %284 = vmatpush1.msra.mxu0 0.0
    %285 = vmatprep.subr.mxu0 0.0
    %286 = vmatpush1.msra.mxu0 0.0
    %287 = vmatprep.subr.mxu0 0.0
    %288 = vmatpush1.msra.mxu0 0.0
    %289 = vmatprep.subr.mxu0 0.0
    %290 = vmatpush1.msra.mxu0 0.0
    %291 = vmatprep.subr.mxu0 0.0
    %292 = vmatpush1.msra.mxu0 0.0
    %293 = vmatprep.subr.mxu0 0.0
    %294 = vmatpush1.msra.mxu0 0.0
    %295 = vmatprep.subr.mxu0 0.0
    %296 = vmatpush1.msra.mxu0 0.0
    %297 = vmatprep.subr.mxu0 0.0
    %298 = vmatpush1.msra.mxu0 0.0
    %299 = vmatprep.subr.mxu0 0.0
    %300 = vmatpush1.msra.mxu0 0.0
    %301 = vmatprep.subr.mxu0 0.0
    %302 = vmatpush1.msra.mxu0 0.0
    %303 = vmatprep.subr.mxu0 0.0
    %304 = vmatpush1.msra.mxu0 0.0
    %305 = vmatprep.subr.mxu0 0.0
    %306 = vmatpush1.msra.mxu0 0.0
    %307 = vmatprep.subr.mxu0 0.0
    %308 = vmatpush1.msra.mxu0 0.0
    %309 = vmatprep.subr.mxu0 0.0
    %310 = vmatpush1.msra.mxu0 0.0
    %311 = vmatprep.subr.mxu0 0.0
    %312 = vmatpush1.msra.mxu0 0.0
    %313 = vmatprep.subr.mxu0 0.0
    %314 = vmatpush1.msra.mxu0 0.0
    %315 = vmatprep.mubr.f32.mxu0 0.0
    %316 = vmatmul.mubr.f32.gmra.mrb[0].mxu0 %v250
    %v317 = vpop.f32.mrb[0].mxu0
    %v318 = vadd.f32 0.0, %v317
    %v319 = vpop.f32.mrb[0].mxu0
    %320 = vdwg.mxu0
    %v321 = vmul.f32 %v18, %v20
    %322 = vmatprep.subr.mxu0 0.0
    %323 = vmatpush1.msra.mxu0 %v21
    %324 = vmatprep.subr.mxu0 0.0
    %325 = vmatpush1.msra.mxu0 %v22
    %326 = vmatprep.subr.mxu0 0.0
    %327 = vmatpush1.msra.mxu0 %v23
    %328 = vmatprep.subr.mxu0 0.0
    %329 = vmatpush1.msra.mxu0 %v24
    %330 = vmatprep.subr.mxu0 0.0
    %331 = vmatpush1.msra.mxu0 %v25
    %332 = vmatprep.subr.mxu0 0.0
    %333 = vmatpush1.msra.mxu0 %v26
    %334 = vmatprep.subr.mxu0 0.0
    %335 = vmatpush1.msra.mxu0 %v27
    %336 = vmatprep.subr.mxu0 0.0
    %337 = vmatpush1.msra.mxu0 %v28
    %338 = vmatprep.subr.mxu0 0.0
    %339 = vmatpush1.msra.mxu0 %v29
    %340 = vmatprep.subr.mxu0 0.0
    %341 = vmatpush1.msra.mxu0 %v30
    %342 = vmatprep.subr.mxu0 0.0
    %343 = vmatpush1.msra.mxu0 %v31
    %344 = vmatprep.subr.mxu0 0.0
    %345 = vmatpush1.msra.mxu0 %v32
    %346 = vmatprep.subr.mxu0 0.0
    %347 = vmatpush1.msra.mxu0 %v33
    %348 = vmatprep.subr.mxu0 0.0
    %349 = vmatpush1.msra.mxu0 %v34
    %350 = vmatprep.subr.mxu0 0.0
    %351 = vmatpush1.msra.mxu0 %v35
    %352 = vmatprep.subr.mxu0 0.0
    %353 = vmatpush1.msra.mxu0 %v36
    %354 = vmatprep.subr.mxu0 0.0
    %355 = vmatpush1.msra.mxu0 0.0
    %356 = vmatprep.subr.mxu0 0.0
    %357 = vmatpush1.msra.mxu0 0.0
    %358 = vmatprep.subr.mxu0 0.0
    %359 = vmatpush1.msra.mxu0 0.0
    %360 = vmatprep.subr.mxu0 0.0
    %361 = vmatpush1.msra.mxu0 0.0
    %362 = vmatprep.subr.mxu0 0.0
    %363 = vmatpush1.msra.mxu0 0.0
    %364 = vmatprep.subr.mxu0 0.0
    %365 = vmatpush1.msra.mxu0 0.0
    %366 = vmatprep.subr.mxu0 0.0
    %367 = vmatpush1.msra.mxu0 0.0
    %368 = vmatprep.subr.mxu0 0.0
    %369 = vmatpush1.msra.mxu0 0.0
    %370 = vmatprep.subr.mxu0 0.0
    %371 = vmatpush1.msra.mxu0 0.0
    %372 = vmatprep.subr.mxu0 0.0
    %373 = vmatpush1.msra.mxu0 0.0
    %374 = vmatprep.subr.mxu0 0.0
    %375 = vmatpush1.msra.mxu0 0.0
    %376 = vmatprep.subr.mxu0 0.0
    %377 = vmatpush1.msra.mxu0 0.0
    %378 = vmatprep.subr.mxu0 0.0
    %379 = vmatpush1.msra.mxu0 0.0
    %380 = vmatprep.subr.mxu0 0.0
    %381 = vmatpush1.msra.mxu0 0.0
    %382 = vmatprep.subr.mxu0 0.0
    %383 = vmatpush1.msra.mxu0 0.0
    %384 = vmatprep.subr.mxu0 0.0
    %385 = vmatpush1.msra.mxu0 0.0
    %386 = vmatprep.mubr.f32.mxu0 0.0
    %387 = vmatmul.mubr.f32.gmra.mrb[0].mxu0 %v321
    %v388 = vpop.f32.mrb[0].mxu0
    %v389 = vadd.f32 0.0, %v388
    %v390 = vpop.f32.mrb[0].mxu0
    %391 = vdwg.mxu0
    %v392 = vmul.f32 %v105, %v176
    %v393 = vmax.f32 %v392, 1e-16
    %v394 = vrsqrt.pop %v393
    %v395 = vmul.f32 %v105, %v247
    %v396 = vmax.f32 %v395, 1e-16
    %v397 = vrsqrt.pop %v396
    %v398 = vmul.f32 %v389, %v397
    %v399 = vmul.f32 %v318, %v394
    %v400 = vsub.f32 %v398, %v399
    %v401 = vadd.f32 %v400, 0.5
    %v402 = vmax.f32 %v401, 0.0
    %v403 = vlaneseq
    %v404 = vshrl.u32 %v403, 7
    %v405 = vlaneseq
    %v406 = vand.u32 %v405, 127
    %s407 = smul.u32 0, 8
    %v408 = vstv %s407
    %v409 = vadd.s32 %v408, %v404
    %v410 = vmul.u32 %v409, 4
    %v411 = vadd.s32 %v410, %v406
    %vm412 = vcmp.lt.s32.totalorder %v411, 8
    %v413 = vsel %vm412, %v402, 0.0
    %vm414 = vcmask 64512
    %v416 = vsel %vm414, 1.0, 0
    %418 = vmatprep.subr.mxu0 0.0
    %419 = vmatpush1.msra.mxu0 %v413
    %420 = vmatprep.subr.mxu0 0.0
    %421 = vmatpush1.msra.mxu0 0.0
    %422 = vmatprep.subr.mxu0 0.0
    %423 = vmatpush1.msra.mxu0 0.0
    %424 = vmatprep.subr.mxu0 0.0
    %425 = vmatpush1.msra.mxu0 0.0
    %426 = vmatprep.subr.mxu0 0.0
    %427 = vmatpush1.msra.mxu0 0.0
    %428 = vmatprep.subr.mxu0 0.0
    %429 = vmatpush1.msra.mxu0 0.0
    %430 = vmatprep.subr.mxu0 0.0
    %431 = vmatpush1.msra.mxu0 0.0
    %432 = vmatprep.subr.mxu0 0.0
    %433 = vmatpush1.msra.mxu0 0.0
    %434 = vmatprep.subr.mxu0 0.0
    %435 = vmatpush1.msra.mxu0 0.0
    %436 = vmatprep.subr.mxu0 0.0
    %437 = vmatpush1.msra.mxu0 0.0
    %438 = vmatprep.subr.mxu0 0.0
    %439 = vmatpush1.msra.mxu0 0.0
    %440 = vmatprep.subr.mxu0 0.0
    %441 = vmatpush1.msra.mxu0 0.0
    %442 = vmatprep.subr.mxu0 0.0
    %443 = vmatpush1.msra.mxu0 0.0
    %444 = vmatprep.subr.mxu0 0.0
    %445 = vmatpush1.msra.mxu0 0.0
    %446 = vmatprep.subr.mxu0 0.0
    %447 = vmatpush1.msra.mxu0 0.0
    %448 = vmatprep.subr.mxu0 0.0
    %449 = vmatpush1.msra.mxu0 0.0
    %450 = vmatprep.subr.mxu0 0.0
    %451 = vmatpush1.msra.mxu0 0.0
    %452 = vmatprep.subr.mxu0 0.0
    %453 = vmatpush1.msra.mxu0 0.0
    %454 = vmatprep.subr.mxu0 0.0
    %455 = vmatpush1.msra.mxu0 0.0
    %456 = vmatprep.subr.mxu0 0.0
    %457 = vmatpush1.msra.mxu0 0.0
    %458 = vmatprep.subr.mxu0 0.0
    %459 = vmatpush1.msra.mxu0 0.0
    %460 = vmatprep.subr.mxu0 0.0
    %461 = vmatpush1.msra.mxu0 0.0
    %462 = vmatprep.subr.mxu0 0.0
    %463 = vmatpush1.msra.mxu0 0.0
    %464 = vmatprep.subr.mxu0 0.0
    %465 = vmatpush1.msra.mxu0 0.0
    %466 = vmatprep.subr.mxu0 0.0
    %467 = vmatpush1.msra.mxu0 0.0
    %468 = vmatprep.subr.mxu0 0.0
    %469 = vmatpush1.msra.mxu0 0.0
    %470 = vmatprep.subr.mxu0 0.0
    %471 = vmatpush1.msra.mxu0 0.0
    %472 = vmatprep.subr.mxu0 0.0
    %473 = vmatpush1.msra.mxu0 0.0
    %474 = vmatprep.subr.mxu0 0.0
    %475 = vmatpush1.msra.mxu0 0.0
    %476 = vmatprep.subr.mxu0 0.0
    %477 = vmatpush1.msra.mxu0 0.0
    %478 = vmatprep.subr.mxu0 0.0
    %479 = vmatpush1.msra.mxu0 0.0
    %480 = vmatprep.subr.mxu0 0.0
    %481 = vmatpush1.msra.mxu0 0.0
    %482 = vmatprep.mubr.f32.mxu0 0.0
    %483 = vmatmul.mubr.f32.gmra.mrb[0].mxu0 %v416
    %v484 = vpop.f32.mrb[0].mxu0
    %v485 = vadd.f32 0.0, %v484
    %v486 = vpop.f32.mrb[0].mxu0
    %487 = vdwg.mxu0
    %vm488 = vcmask 24576
    %v489 = vsel %vm488, %v485, 0.0
    %490 = vadd.xlane.f32.xlu0 %v489
    %v491 = vpop.xlane.xlu0 %490
    %v492 = vrot.slane %v491, 4
    %v493 = vadd.f32 %v491, %v492
    %v494 = vrot.slane %v493, 2
    %v495 = vadd.f32 %v493, %v494
    %v496 = vrot.slane %v495, 1
    %v497 = vadd.f32 %v495, %v496
    %s498 = vtos %v497
    %v499 = vstv %s498
    %500 = vst [vmem:[#allocation2] sm:$0xff] %v499
    // Predicated region
    $region18: #{tpu_custom_call.1} parent=1 // pred_check
      _
    $region19: #{tpu_custom_call.1} parent=1 // pred_check_branch
      %502 = sbr.rel (0) target = $region21
    $region20: #{tpu_custom_call.1} parent=1 // pred_region
      %s504 = ssub.s32 128, 128
      %505 = vsyncadd [#allocation3], %s504
      %s507 = sshll.u32 [#allocation2], 4
      %s508 = int_to_ptr.vmem [resolvable:$true] %s507
      %510 = dma.vmem_to_hbm [thread:$0]  %s508, 128, %s4, [#allocation3]
    $region21: #{tpu_custom_call.1} parent=1 // pred_fallthru
      _
    // Predicated region
    $region22: #{tpu_custom_call.1} parent=1 // pred_check
      _
    $region23: #{tpu_custom_call.1} parent=1 // pred_check_branch
      %512 = sbr.rel (0) target = $region25
    $region24: #{tpu_custom_call.1} parent=1 // pred_region
      %513 = dma.done [#allocation3], 128
    $region25: #{tpu_custom_call.1} parent=1 // pred_fallthru
      _
    %514 = vsyncpa [#allocation3], 1

</llo_original>
